<compile_context>
chip_gen: v7x
topology: tpu7x:2x2x1
jax: 0.10.0
libtpu: 0.0.40
codegen_flags: <defaults>
</compile_context>

<pallas_src>
import functools
import math

import jax
import jax.numpy as jnp
from jax.experimental import pallas as pl
from jax.experimental.pallas import tpu as pltpu

NEG_INF = -1e9
VMEM_LIMIT = 48 * 1024 * 1024  # fits v7x (64 MiB physical) with headroom


def _pick_tile(dim, target, align):
    """Largest align-multiple tile <= target that evenly divides dim, else dim."""
    if dim <= target:
        return dim
    t = (target // align) * align
    while t >= align:
        if dim % t == 0:
            return t
        t -= align
    return dim


# ----------------------------------------------------------------------------
# Pallas kernels
# ----------------------------------------------------------------------------
def _linear_kernel(x_ref, w_ref, b_ref, o_ref, acc_ref, *, activation):
    k = pl.program_id(2)

    @pl.when(k == 0)
    def _():
        acc_ref[...] = jnp.zeros_like(acc_ref)

    acc_ref[...] += jnp.dot(
        x_ref[...].astype(jnp.bfloat16),
        w_ref[...].astype(jnp.bfloat16),
        preferred_element_type=jnp.float32)

    @pl.when(k == pl.num_programs(2) - 1)
    def _():
        y = acc_ref[...] + b_ref[...].astype(jnp.float32)
        if activation == "relu":
            y = jnp.maximum(y, 0.0)
        o_ref[...] = y.astype(o_ref.dtype)


def linear(x, w, b, activation=None):
    """x: (M, K) @ w: (K, N) + b: (N,) -> (M, N), optional fused ReLU.

    Tiled + pipelined: bf16 MXU operands, f32 accumulator in VMEM scratch.
    """
    M, K = x.shape
    N = w.shape[1]
    tm = _pick_tile(M, 256, 8)
    tn = _pick_tile(N, 256, 128)
    tk = _pick_tile(K, 512, 128)
    grid = (M // tm, N // tn, K // tk)
    return pl.pallas_call(
        functools.partial(_linear_kernel, activation=activation),
        out_shape=jax.ShapeDtypeStruct((M, N), jnp.float32),
        grid=grid,
        in_specs=[
            pl.BlockSpec((tm, tk), lambda i, j, k: (i, k)),
            pl.BlockSpec((tk, tn), lambda i, j, k: (k, j)),
            pl.BlockSpec((1, tn), lambda i, j, k: (0, j)),
        ],
        out_specs=pl.BlockSpec((tm, tn), lambda i, j, k: (i, j)),
        scratch_shapes=[pltpu.VMEM((tm, tn), jnp.float32)],
        compiler_params=pltpu.CompilerParams(
            dimension_semantics=("parallel", "parallel", "arbitrary"),
            vmem_limit_bytes=VMEM_LIMIT),
    )(x, w, b.reshape(1, N))


def _add_layernorm_kernel(x_ref, r_ref, g_ref, b_ref, o_ref, *, eps):
    x = x_ref[...].astype(jnp.float32) + r_ref[...].astype(jnp.float32)
    mean = jnp.mean(x, axis=-1, keepdims=True)
    var = jnp.mean(jnp.square(x - mean), axis=-1, keepdims=True)
    y = (x - mean) * jax.lax.rsqrt(var + eps)
    o_ref[...] = (y * g_ref[...] + b_ref[...]).astype(o_ref.dtype)


def add_layer_norm(x, residual, gamma, beta, eps=1e-5):
    """LayerNorm(x + residual) with the residual add fused into the kernel."""
    B, S, D = x.shape
    M = B * S
    tm = _pick_tile(M, 1024, 8)
    out = pl.pallas_call(
        functools.partial(_add_layernorm_kernel, eps=eps),
        out_shape=jax.ShapeDtypeStruct((M, D), jnp.float32),
        grid=(M // tm,),
        in_specs=[
            pl.BlockSpec((tm, D), lambda i: (i, 0)),
            pl.BlockSpec((tm, D), lambda i: (i, 0)),
            pl.BlockSpec((1, D), lambda i: (0, 0)),
            pl.BlockSpec((1, D), lambda i: (0, 0)),
        ],
        out_specs=pl.BlockSpec((tm, D), lambda i: (i, 0)),
        compiler_params=pltpu.CompilerParams(
            dimension_semantics=("parallel",),
            vmem_limit_bytes=VMEM_LIMIT),
    )(x.reshape(M, D), residual.reshape(M, D),
      gamma.reshape(1, D), beta.reshape(1, D))
    return out.reshape(B, S, D)


def _attention_kernel(q_ref, k_ref, v_ref, kb_ref, o_ref, *, scale, causal):
    # One batch element per grid step; all heads processed together.
    q = q_ref[...].astype(jnp.bfloat16)          # (H, Sq, Dh)
    k = k_ref[...].astype(jnp.bfloat16)          # (H, Sk, Dh)
    v = v_ref[...].astype(jnp.bfloat16)          # (H, Sk, Dh)

    s = jnp.einsum("hqd,hkd->hqk", q, k,
                   preferred_element_type=jnp.float32) * scale
    s = s + kb_ref[...]                          # (1, Sk) key-pad additive bias
    if causal:
        Sq, Sk = s.shape[1], s.shape[2]
        qi = jax.lax.broadcasted_iota(jnp.int32, (Sq, Sk), 0)
        kj = jax.lax.broadcasted_iota(jnp.int32, (Sq, Sk), 1)
        s = jnp.where((kj <= qi)[None, :, :], s, NEG_INF)

    s = s - jnp.max(s, axis=-1, keepdims=True)
    p = jnp.exp(s)
    p = p * pl.reciprocal(jnp.sum(p, axis=-1, keepdims=True), approx=True)

    o = jnp.einsum("hqk,hkd->hqd", p.astype(jnp.bfloat16), v,
                   preferred_element_type=jnp.float32)
    o_ref[...] = o.astype(o_ref.dtype)


def scaled_dot_attention(q, k, v, key_bias, causal):
    """q: (B,H,Sq,Dh)  k,v: (B,H,Sk,Dh)  key_bias: (B,1,Sk) additive f32."""
    B, H, Sq, Dh = q.shape
    Sk = k.shape[2]
    scale = 1.0 / math.sqrt(Dh)
    # TODO(synk): switch to a flash-style online softmax over Sk tiles for long
    # sequences (required once (H,Sq,Sk) scores no longer fit VMEM, esp. v7x).
    return pl.pallas_call(
        functools.partial(_attention_kernel, scale=scale, causal=causal),
        out_shape=jax.ShapeDtypeStruct((B, H, Sq, Dh), jnp.float32),
        grid=(B,),
        in_specs=[
            pl.BlockSpec((None, H, Sq, Dh), lambda b: (b, 0, 0, 0)),
            pl.BlockSpec((None, H, Sk, Dh), lambda b: (b, 0, 0, 0)),
            pl.BlockSpec((None, H, Sk, Dh), lambda b: (b, 0, 0, 0)),
            pl.BlockSpec((None, 1, Sk), lambda b: (b, 0, 0)),
        ],
        out_specs=pl.BlockSpec((None, H, Sq, Dh), lambda b: (b, 0, 0, 0)),
        compiler_params=pltpu.CompilerParams(
            dimension_semantics=("parallel",),
            vmem_limit_bytes=VMEM_LIMIT),
    )(q, k, v, key_bias)


# ----------------------------------------------------------------------------
# Model glue (plain JAX): params, embeddings, masks, layer wiring
# ----------------------------------------------------------------------------
def sinusoidal_pe(max_len, d_model):
    pos = jnp.arange(max_len, dtype=jnp.float32)[:, None]
    i = jnp.arange(0, d_model, 2, dtype=jnp.float32)
    div = jnp.exp(-math.log(10000.0) * i / d_model)
    pe = jnp.zeros((max_len, d_model), jnp.float32)
    pe = pe.at[:, 0::2].set(jnp.sin(pos * div))
    pe = pe.at[:, 1::2].set(jnp.cos(pos * div))
    return pe


def key_pad_bias(ids, pad_id=0):
    """Additive key-pad bias (0 / -1e9) of shape (B, 1, Sk) — O(B*S), not O(S^2)."""
    B, S = ids.shape
    keep = ids != pad_id
    return jnp.where(keep, 0.0, NEG_INF).astype(jnp.float32).reshape(B, 1, S)


def init_params(key, enc_vocab, dec_vocab, d_model, num_layer, d_ff):
    keys = iter(jax.random.split(key, 512))

    def dense(fin, fout):
        w = (jax.random.normal(next(keys), (fin, fout), jnp.float32) * 0.02)
        return {"w": w.astype(jnp.bfloat16), "b": jnp.zeros((fout,), jnp.float32)}

    def mha_self():   # fused QKV projection
        return {"qkv": dense(d_model, 3 * d_model), "o": dense(d_model, d_model)}

    def mha_cross():  # fused KV projection (q comes from decoder stream)
        return {"q": dense(d_model, d_model), "kv": dense(d_model, 2 * d_model),
                "o": dense(d_model, d_model)}

    def ln():
        return {"g": jnp.ones((d_model,), jnp.float32),
                "b": jnp.zeros((d_model,), jnp.float32)}

    def ffn():
        return {"w1": dense(d_model, d_ff), "w2": dense(d_ff, d_model)}

    enc_layers = [{"attn": mha_self(), "ln1": ln(), "ffn": ffn(), "ln2": ln()}
                  for _ in range(num_layer)]
    dec_layers = [{"self": mha_self(), "ln1": ln(), "cross": mha_cross(),
                   "ln2": ln(), "ffn": ffn(), "ln3": ln()}
                  for _ in range(num_layer)]
    return {
        "enc_emb": jax.random.normal(next(keys), (enc_vocab, d_model), jnp.float32) * 0.02,
        "dec_emb": jax.random.normal(next(keys), (dec_vocab, d_model), jnp.float32) * 0.02,
        "enc_layers": enc_layers,
        "dec_layers": dec_layers,
        "answer": dense(d_model, dec_vocab),
    }


def embed(ids, table, d_model, pe):
    x = jnp.take(table, ids, axis=0) * math.sqrt(d_model)
    return x + pe[: ids.shape[1]][None, :, :]


def mha_self(x, key_bias, causal, p, n_head):
    B, S, D = x.shape
    dh = D // n_head
    qkv = linear(x.reshape(B * S, D), p["qkv"]["w"], p["qkv"]["b"])  # (B*S, 3D)
    qkv = qkv.reshape(B, S, 3, n_head, dh)
    q = qkv[:, :, 0].transpose(0, 2, 1, 3)
    k = qkv[:, :, 1].transpose(0, 2, 1, 3)
    v = qkv[:, :, 2].transpose(0, 2, 1, 3)
    o = scaled_dot_attention(q, k, v, key_bias, causal)       # (B, H, S, dh)
    o = o.transpose(0, 2, 1, 3).reshape(B * S, D)
    return linear(o, p["o"]["w"], p["o"]["b"]).reshape(B, S, D)


def mha_cross(q_in, kv_in, key_bias, p, n_head):
    B, Sq, D = q_in.shape
    Sk = kv_in.shape[1]
    dh = D // n_head
    q = linear(q_in.reshape(B * Sq, D), p["q"]["w"], p["q"]["b"])
    q = q.reshape(B, Sq, n_head, dh).transpose(0, 2, 1, 3)
    kv = linear(kv_in.reshape(B * Sk, D), p["kv"]["w"], p["kv"]["b"])
    kv = kv.reshape(B, Sk, 2, n_head, dh)
    k = kv[:, :, 0].transpose(0, 2, 1, 3)
    v = kv[:, :, 1].transpose(0, 2, 1, 3)
    o = scaled_dot_attention(q, k, v, key_bias, causal=False)  # (B, H, Sq, dh)
    o = o.transpose(0, 2, 1, 3).reshape(B * Sq, D)
    return linear(o, p["o"]["w"], p["o"]["b"]).reshape(B, Sq, D)


def feed_forward(x, p):
    B, S, D = x.shape
    h = linear(x.reshape(B * S, D), p["w1"]["w"], p["w1"]["b"], activation="relu")
    o = linear(h, p["w2"]["w"], p["w2"]["b"])
    return o.reshape(B, S, D)


def encoder_layer(x, key_bias, p, n_head):
    a = mha_self(x, key_bias, False, p["attn"], n_head)
    x = add_layer_norm(a, x, p["ln1"]["g"], p["ln1"]["b"])
    f = feed_forward(x, p["ffn"])
    x = add_layer_norm(f, x, p["ln2"]["g"], p["ln2"]["b"])
    return x


def decoder_layer(x, enc_out, dec_key_bias, cross_key_bias, p, n_head):
    a = mha_self(x, dec_key_bias, True, p["self"], n_head)
    x = add_layer_norm(a, x, p["ln1"]["g"], p["ln1"]["b"])
    c = mha_cross(x, enc_out, cross_key_bias, p["cross"], n_head)
    x = add_layer_norm(c, x, p["ln2"]["g"], p["ln2"]["b"])
    f = feed_forward(x, p["ffn"])
    x = add_layer_norm(f, x, p["ln3"]["g"], p["ln3"]["b"])
    return x


def transformer_forward(params, src_ids, tgt_ids, d_model, n_head, pe_enc, pe_dec):
    enc_key_bias = key_pad_bias(src_ids)     # encoder self-attn keys = src
    dec_key_bias = key_pad_bias(tgt_ids)     # decoder self-attn keys = tgt (+ causal in-kernel)
    cross_key_bias = enc_key_bias            # cross-attn keys = src

    src = embed(src_ids, params["enc_emb"], d_model, pe_enc)
    for lp in params["enc_layers"]:
        src = encoder_layer(src, enc_key_bias, lp, n_head)

    tgt = embed(tgt_ids, params["dec_emb"], d_model, pe_dec)
    for lp in params["dec_layers"]:
        tgt = decoder_layer(tgt, src, dec_key_bias, cross_key_bias, lp, n_head)

    B, St, D = tgt.shape
    # TODO(synk): for tiny dec_vocab (<128) pad N to a lane-dense multiple of 128.
    out = linear(tgt.reshape(B * St, D), params["answer"]["w"], params["answer"]["b"])
    return out.reshape(B, St, -1)


# ----------------------------------------------------------------------------
if __name__ == "__main__":
    enc_vocab_size, dec_vocab_size = 32, 32
    d_model, n_head, num_layer = 32, 4, 2
    d_ff = 4 * d_model
    B, S_src, S_tgt = 2, 8, 8

    key = jax.random.PRNGKey(0)
    k_params, k_src, k_tgt = jax.random.split(key, 3)

    params = init_params(k_params, enc_vocab_size, dec_vocab_size,
                         d_model, num_layer, d_ff)
    src_q = jax.random.randint(k_src, (B, S_src), 0, enc_vocab_size, dtype=jnp.int32)
    tgt_q = jax.random.randint(k_tgt, (B, S_tgt), 0, dec_vocab_size, dtype=jnp.int32)

    pe_enc = sinusoidal_pe(enc_vocab_size, d_model)   # PositionalEncoding(enc_vocab, d_model)
    pe_dec = sinusoidal_pe(dec_vocab_size, d_model)

    out = transformer_forward(params, src_q, tgt_q, d_model, n_head, pe_enc, pe_dec)
    out = jax.block_until_ready(out)

    assert out.shape == (B, S_tgt, dec_vocab_size), out.shape
    assert bool(jnp.all(jnp.isfinite(out)))
    print("KERNEL_OK")
</pallas_src>

<mosaic_0001>
module attributes {stable_mosaic.version = 11 : i64} {
  func.func @_linear_kernel(%arg0: i32, %arg1: i32, %arg2: i32, %arg3: memref<16x32xf32, #tpu.memory_space<vmem>>, %arg4: memref<32x96xbf16, #tpu.memory_space<vmem>>, %arg5: memref<1x96xf32, #tpu.memory_space<vmem>>, %arg6: memref<16x96xf32, #tpu.memory_space<vmem>>, %arg7: memref<16x96xf32, #tpu.memory_space<vmem>>) attributes {dimension_semantics = [#tpu.dimension_semantics<parallel>, #tpu.dimension_semantics<parallel>, #tpu.dimension_semantics<arbitrary>], iteration_bounds = array<i64: 1, 1, 1>, scalar_prefetch = 0 : i64, scratch_operands = 1 : i64, tpu.core_type = #tpu.core_type<tc>, window_params = [{transform_indices = @transform_0, window_bounds = array<i64: 16, 32>}, {transform_indices = @transform_1, window_bounds = array<i64: 32, 96>}, {transform_indices = @transform_2, window_bounds = array<i64: 1, 96>}, {transform_indices = @transform_3, window_bounds = array<i64: 16, 96>}]} {
    %c0_i32 = arith.constant 0 : i32
    %0 = arith.cmpi eq, %arg2, %c0_i32 : i32
    %1 = arith.extui %0 : i1 to i32
    %c0_i32_0 = arith.constant 0 : i32
    %2 = arith.cmpi ne, %1, %c0_i32_0 : i32
    scf.if %2 {
      %cst_10 = arith.constant 0.000000e+00 : f32
      %13 = vector.broadcast %cst_10 : f32 to vector<16x96xf32>
      %c0_11 = arith.constant 0 : index
      %c0_12 = arith.constant 0 : index
      %14 = vector.load %arg7[%c0_11, %c0_12] : memref<16x96xf32, #tpu.memory_space<vmem>>, vector<16x96xf32>
      tpu.vector_store %arg7[%c0_11, %c0_12], %13 {strides = array<i32>} : memref<16x96xf32, #tpu.memory_space<vmem>>, vector<16x96xf32>,
    } else {
    }
    %c0 = arith.constant 0 : index
    %c0_1 = arith.constant 0 : index
    %3 = vector.load %arg7[%c0, %c0_1] : memref<16x96xf32, #tpu.memory_space<vmem>>, vector<16x96xf32>
    %c0_2 = arith.constant 0 : index
    %c0_3 = arith.constant 0 : index
    %4 = vector.load %arg3[%c0_2, %c0_3] : memref<16x32xf32, #tpu.memory_space<vmem>>, vector<16x32xf32>
    %5 = arith.truncf %4 : vector<16x32xf32> to vector<16x32xbf16>
    %c0_4 = arith.constant 0 : index
    %c0_5 = arith.constant 0 : index
    %6 = vector.load %arg4[%c0_4, %c0_5] : memref<32x96xbf16, #tpu.memory_space<vmem>>, vector<32x96xbf16>
    %cst = arith.constant dense<0.000000e+00> : vector<16x96xf32>
    %7 = tpu.matmul %5, %6, %cst {dimension_numbers = #tpu.dot_dimension_numbers<[1], [0], [0], [1], [0, 0, 1, 1], [], []>} : vector<16x32xbf16>, vector<32x96xbf16>, vector<16x96xf32> -> vector<16x96xf32>
    %8 = arith.addf %3, %7 : vector<16x96xf32>
    %c0_6 = arith.constant 0 : index
    %c0_7 = arith.constant 0 : index
    %9 = vector.load %arg7[%c0_6, %c0_7] : memref<16x96xf32, #tpu.memory_space<vmem>>, vector<16x96xf32>
    tpu.vector_store %arg7[%c0_6, %c0_7], %8 {strides = array<i32>} : memref<16x96xf32, #tpu.memory_space<vmem>>, vector<16x96xf32>,
    %c0_i32_8 = arith.constant 0 : i32
    %10 = arith.cmpi eq, %arg2, %c0_i32_8 : i32
    %11 = arith.extui %10 : i1 to i32
    %c0_i32_9 = arith.constant 0 : i32
    %12 = arith.cmpi ne, %11, %c0_i32_9 : i32
    scf.if %12 {
      %c0_10 = arith.constant 0 : index
      %c0_11 = arith.constant 0 : index
      %13 = vector.load %arg7[%c0_10, %c0_11] : memref<16x96xf32, #tpu.memory_space<vmem>>, vector<16x96xf32>
      %c0_12 = arith.constant 0 : index
      %c0_13 = arith.constant 0 : index
      %14 = vector.load %arg5[%c0_12, %c0_13] : memref<1x96xf32, #tpu.memory_space<vmem>>, vector<1x96xf32>
      %15 = vector.broadcast %14 : vector<1x96xf32> to vector<16x96xf32>
      %16 = arith.addf %13, %15 : vector<16x96xf32>
      %c0_14 = arith.constant 0 : index
      %c0_15 = arith.constant 0 : index
      %17 = vector.load %arg6[%c0_14, %c0_15] : memref<16x96xf32, #tpu.memory_space<vmem>>, vector<16x96xf32>
      tpu.vector_store %arg6[%c0_14, %c0_15], %16 {strides = array<i32>} : memref<16x96xf32, #tpu.memory_space<vmem>>, vector<16x96xf32>,
    } else {
    }
    return
  }
  func.func @transform_0(%arg0: i32, %arg1: i32, %arg2: i32) -> (i32, i32) {
    %c0_i32 = arith.constant 0 : i32
    return %arg0, %arg2 : i32, i32
  }
  func.func @transform_1(%arg0: i32, %arg1: i32, %arg2: i32) -> (i32, i32) {
    %c0_i32 = arith.constant 0 : i32
    return %arg2, %arg1 : i32, i32
  }
  func.func @transform_2(%arg0: i32, %arg1: i32, %arg2: i32) -> (i32, i32) {
    %c0_i32 = arith.constant 0 : i32
    %c0_i32_0 = arith.constant 0 : i32
    return %c0_i32, %arg1 : i32, i32
  }
  func.func @transform_3(%arg0: i32, %arg1: i32, %arg2: i32) -> (i32, i32) {
    %c0_i32 = arith.constant 0 : i32
    return %arg0, %arg1 : i32, i32
  }
}

</mosaic_0001>

<llo_original>
// kernel: tpu_custom_call.1
$region0: #{tpu_custom_call.1}
  #allocation0 [shape = 'u32[]', space=smem, size = 0x4, offset = 0x4, fixed_abs, tag = 'smem constant byte address 0x4 - core index']
  #allocation1 [shape = 'u32[144,128]{1,0:T(1,128)}', space=vmem, size = 0x12000, scoped, tag = 'internal scratch']
  #allocation2 [shape = 'f32[16,96]{1,0:T(8,128)}', space=vmem, size = 0x2000, scoped, tag = 'scratch operand']
  %s0 = inlined_call_operand.hbm [shape: f32[16,32], index: 0, kind: input, shape index: {}]
  %s1 = inlined_call_operand.hbm [shape: bf16[32,96], index: 1, kind: input, shape index: {}]
  %s2 = inlined_call_operand.vmem [shape: f32[1,96], index: 2, kind: input, shape index: {}]
  %s3 = inlined_call_operand.hbm [shape: f32[16,96], index: 3, kind: output, shape index: {}]
  %s4 = sld [smem:[#allocation0]]
  $region38: #{tpu_custom_call.1} parent=0
    _
  %s6 = ssub.s32 1, %s4
  %s7 = scalar_select 0, %s6, %s4
  $region1: #{tpu_custom_call.1} parent=0
    #allocation3 [shape = 'u8[8192]{0}', space=vmem, size = 0x2000, scoped, tag = 'input window, operand 0, single buffered']
    #allocation4 [shape = 's32[1]{0}', space=sflag, size = 0x4, scoped, tag = 'scoped memory for tpu_custom_call.1']
    #allocation5 [shape = 's32[1]{0}', space=sflag, size = 0x4, scoped, tag = 'scoped memory for tpu_custom_call.1']
    #allocation6 [shape = 'u8[8192]{0}', space=vmem, size = 0x2000, scoped, tag = 'input window, operand 1, single buffered']
    #allocation7 [shape = 's32[1]{0}', space=sflag, size = 0x4, scoped, tag = 'scoped memory for tpu_custom_call.1']
    #allocation8 [shape = 'u8[8192]{0}', space=vmem, size = 0x2000, scoped, tag = 'output window, operand 0, single buffered']
    %8 = vsyncpa [#allocation4], 0
    %9 = vsyncpa [#allocation7], 0
    %10 = vsyncpa [#allocation5], 0
    // Predicated region
    $region2: #{tpu_custom_call.1} parent=1 // pred_check
      _
    $region3: #{tpu_custom_call.1} parent=1 // pred_check_branch
      %12 = sbr.rel (0) target = $region5
    $region4: #{tpu_custom_call.1} parent=1 // pred_region
      %s14 = ssub.s32 256, 256
      %15 = vsyncadd [#allocation4], %s14
      %s16 = sshll.u32 [#allocation3], 4
      %s17 = int_to_ptr.vmem [resolvable:$true] %s16
      %22 = dma.hbm_to_vmem [thread:$0]  %s0, 256, %s17, [#allocation4], 128, 128, 8
    $region5: #{tpu_custom_call.1} parent=1 // pred_fallthru
      _
    // Predicated region
    $region6: #{tpu_custom_call.1} parent=1 // pred_check
      _
    $region7: #{tpu_custom_call.1} parent=1 // pred_check_branch
      %24 = sbr.rel (0) target = $region9
    $region8: #{tpu_custom_call.1} parent=1 // pred_region
      %s26 = ssub.s32 256, 256
      %27 = vsyncadd [#allocation7], %s26
      %s28 = sshll.u32 [#allocation6], 4
      %s29 = int_to_ptr.vmem [resolvable:$true] %s28
      %34 = dma.hbm_to_vmem [thread:$0]  %s1, 256, %s29, [#allocation7], 64, 64, 4
    $region9: #{tpu_custom_call.1} parent=1 // pred_fallthru
      _
    // Predicated region
    $region10: #{tpu_custom_call.1} parent=1 // pred_check
      _
    $region11: #{tpu_custom_call.1} parent=1 // pred_check_branch
      %36 = sbr.rel (0) target = $region13
    $region12: #{tpu_custom_call.1} parent=1 // pred_region
      _
    $region13: #{tpu_custom_call.1} parent=1 // pred_fallthru
      _
    // Predicated region
    $region14: #{tpu_custom_call.1} parent=1 // pred_check
      _
    $region15: #{tpu_custom_call.1} parent=1 // pred_check_branch
      %38 = sbr.rel (0) target = $region17
    $region16: #{tpu_custom_call.1} parent=1 // pred_region
      %39 = dma.done [#allocation4], 256
    $region17: #{tpu_custom_call.1} parent=1 // pred_fallthru
      _
    // Predicated region
    $region18: #{tpu_custom_call.1} parent=1 // pred_check
      _
    $region19: #{tpu_custom_call.1} parent=1 // pred_check_branch
      %41 = sbr.rel (0) target = $region21
    $region20: #{tpu_custom_call.1} parent=1 // pred_region
      %42 = dma.done [#allocation7], 256
    $region21: #{tpu_custom_call.1} parent=1 // pred_fallthru
      _
    %p44 = scmp.eq.s32.totalorder 0, 0
    // Predicated region
    $region22: #{tpu_custom_call.1} parent=1 // pred_check
      %p45 = pneg %p44
    $region23: #{tpu_custom_call.1} parent=1 // pred_check_branch
      %47 = sbr.rel (%p45) target = $region25
    $region24: #{tpu_custom_call.1} parent=1 // pred_region
      %vm48 = vcmask 785408
      %49 = vst.msk [vmem:[#allocation2] sm:$0xff] %vm48, 0.0
      %50 = vst.msk [vmem:[#allocation2 + $0x8] sm:$0xff] %vm48, 0.0
    $region25: #{tpu_custom_call.1} parent=1 // pred_fallthru
      _
    %v51 = vld [vmem:[#allocation2] sm:$0xff]
    %v52 = vld [vmem:[#allocation2 + $0x8] sm:$0xff]
    %v53 = vld [vmem:[#allocation3] sm:$0xff]
    %v54 = vld [vmem:[#allocation3 + $0x8] sm:$0xff]
    %v55 = vpack.c.bf16 %v54, %v53
    %v56 = vld [vmem:[#allocation6] sm:$0xf]
    %v57 = vld [vmem:[#allocation6 + $0x4] sm:$0xf]
    %v58 = vld [vmem:[#allocation6 + $0x8] sm:$0xf]
    %v59 = vld [vmem:[#allocation6 + $0xc] sm:$0xf]
    %v64 = vunpack.c.l.b16 %v56
    %v65 = vunpack.c.l.b16 %v57
    %v66 = vunpack.c.l.b16 %v58
    %v67 = vunpack.c.l.b16 %v59
    %v68 = vpack.c.b16 %v65, %v64
    %v69 = vpack.c.b16 %v67, %v66
    %vm72 = vcmask 261120
    %v74 = vsel %vm72, %v55, 0
    %76 = vmatprep.subr.bf16.mxu0 0
    %77 = vmatpush1.bf16.msra.mxu0 %v68
    %78 = vmatprep.subr.bf16.mxu0 0
    %79 = vmatpush1.bf16.msra.mxu0 %v69
    %80 = vmatprep.subr.bf16.mxu0 0
    %81 = vmatpush1.bf16.msra.mxu0 0
    %82 = vmatprep.subr.bf16.mxu0 0
    %83 = vmatpush1.bf16.msra.mxu0 0
    %84 = vmatprep.subr.bf16.mxu0 0
    %85 = vmatpush1.bf16.msra.mxu0 0
    %86 = vmatprep.subr.bf16.mxu0 0
    %87 = vmatpush1.bf16.msra.mxu0 0
    %88 = vmatprep.subr.bf16.mxu0 0
    %89 = vmatpush1.bf16.msra.mxu0 0
    %90 = vmatprep.subr.bf16.mxu0 0
    %91 = vmatpush1.bf16.msra.mxu0 0
    %92 = vmatprep.subr.bf16.mxu0 0
    %93 = vmatpush1.bf16.msra.mxu0 0
    %94 = vmatprep.subr.bf16.mxu0 0
    %95 = vmatpush1.bf16.msra.mxu0 0
    %96 = vmatprep.subr.bf16.mxu0 0
    %97 = vmatpush1.bf16.msra.mxu0 0
    %98 = vmatprep.subr.bf16.mxu0 0
    %99 = vmatpush1.bf16.msra.mxu0 0
    %100 = vmatprep.subr.bf16.mxu0 0
    %101 = vmatpush1.bf16.msra.mxu0 0
    %102 = vmatprep.subr.bf16.mxu0 0
    %103 = vmatpush1.bf16.msra.mxu0 0
    %104 = vmatprep.subr.bf16.mxu0 0
    %105 = vmatpush1.bf16.msra.mxu0 0
    %106 = vmatprep.subr.bf16.mxu0 0
    %107 = vmatpush1.bf16.msra.mxu0 0
    %108 = vmatprep.mubr.bf16.mxu0 0
    %109 = vmatmul.mubr.bf16.gmra.mrb[0].mxu0 %v74
    %v110 = vpop.f32.mrb[0].mxu0
    %v111 = vadd.f32 0.0, %v110
    %v112 = vpop.f32.mrb[0].mxu0
    %v113 = vpop.f32.mrb[0].mxu0
    %v114 = vadd.f32 0.0, %v113
    %v115 = vpop.f32.mrb[0].mxu0
    %116 = vdwg.mxu0
    %v117 = vadd.f32 %v51, %v111
    %v118 = vadd.f32 %v52, %v114
    %vm119 = vcmask 785408
    %120 = vst.msk [vmem:[#allocation2] sm:$0xff] %vm119, %v117
    %121 = vst.msk [vmem:[#allocation2 + $0x8] sm:$0xff] %vm119, %v118
    // Predicated region
    $region26: #{tpu_custom_call.1} parent=1 // pred_check
      %p122 = pneg %p44
    $region27: #{tpu_custom_call.1} parent=1 // pred_check_branch
      %124 = sbr.rel (%p122) target = $region29
    $region28: #{tpu_custom_call.1} parent=1 // pred_region
      %v125 = vld [vmem:[#allocation2] sm:$0xff]
      %v126 = vld [vmem:[#allocation2 + $0x8] sm:$0xff]
      %v127 = vld [vmem:[%s2] sm:$0x1]
      %v129 = vlaneseq
      %v130 = vshrl.u32 %v129, 7
      %v131 = vsub.s32 0, %v130
      %v132 = vrot.slane %v127, %v131
      %v134 = vadd.f32 %v125, %v132
      %v135 = vadd.f32 %v126, %v132
      %136 = vst.msk [vmem:[#allocation8] sm:$0xff] %vm119, %v134
      %137 = vst.msk [vmem:[#allocation8 + $0x8] sm:$0xff] %vm119, %v135
    $region29: #{tpu_custom_call.1} parent=1 // pred_fallthru
      _
    // Predicated region
    $region30: #{tpu_custom_call.1} parent=1 // pred_check
      _
    $region31: #{tpu_custom_call.1} parent=1 // pred_check_branch
      %139 = sbr.rel (0) target = $region33
    $region32: #{tpu_custom_call.1} parent=1 // pred_region
      %s141 = ssub.s32 256, 256
      %142 = vsyncadd [#allocation5], %s141
      %s143 = sshll.u32 [#allocation8], 4
      %s144 = int_to_ptr.vmem [resolvable:$true] %s143
      %149 = dma.vmem_to_hbm [thread:$0]  %s144, 256, %s3, [#allocation5], 128, 128, 8
    $region33: #{tpu_custom_call.1} parent=1 // pred_fallthru
      _
    // Predicated region
    $region34: #{tpu_custom_call.1} parent=1 // pred_check
      _
    $region35: #{tpu_custom_call.1} parent=1 // pred_check_branch
      %151 = sbr.rel (0) target = $region37
    $region36: #{tpu_custom_call.1} parent=1 // pred_region
      %152 = dma.done [#allocation5], 256
    $region37: #{tpu_custom_call.1} parent=1 // pred_fallthru
      _
    %153 = vsyncpa [#allocation4], 1
    %154 = vsyncpa [#allocation7], 1
    %155 = vsyncpa [#allocation5], 1

</llo_original>
